<compile_context>
chip_gen: v7x
topology: tpu7x:2x2x1
jax: 0.10.0
libtpu: 0.0.40
codegen_flags: <defaults>
</compile_context>

<pallas_src>
import functools

import jax
import jax.numpy as jnp
from jax.experimental import pallas as pl
from jax.experimental.pallas import tpu as pltpu


def _component_attention_kernel(z_ref, x_ref, wf_ref, bf_ref, wx_ref, bx_ref,
                                res_ref, score_ref, *, N):
    tb, D = x_ref.shape          # batch tile, in_size
    H = wf_ref.shape[1]          # hidden_size

    z = z_ref[...].astype(jnp.float32)        # (tb*N, D), rows are b-major: r = b*N + n
    x = x_ref[...].astype(jnp.float32)        # (tb, D)

    # Two MXU matmuls (separate weights -> 128-aligned column blocks, no dead
    # output columns), tanh on the VPU/EUP.
    hz = jnp.tanh(
        jnp.dot(z, wf_ref[...].astype(jnp.float32),
                preferred_element_type=jnp.float32)
        + bf_ref[...].astype(jnp.float32))    # (tb*N, H)
    hx = jnp.tanh(
        jnp.dot(x, wx_ref[...].astype(jnp.float32),
                preferred_element_type=jnp.float32)
        + bx_ref[...].astype(jnp.float32))    # (tb, H)

    # logits[b, n] = <hz[b, n], hx[b]> : single VPU multiply + single XLU
    # reduce over H (width-1 contraction kept off the MXU, no per-n slice loop).
    hz3 = hz.reshape(tb, N, H)
    logits = jnp.sum(hz3 * hx[:, None, :], axis=-1)            # (tb, N)

    # Max-subtracted softmax over the N components (dim=1 in the PyTorch code).
    m = jnp.max(logits, axis=-1, keepdims=True)
    e = jnp.exp(logits - m)
    denom = jnp.sum(e, axis=-1, keepdims=True)
    # EUP vrcp (otherwise-idle slot) + one Newton step on the VPU.
    r = pl.reciprocal(denom, approx=True)
    r = r * (2.0 - denom * r)
    scores = e * r                                             # (tb, N)

    # Weighted combination — the PyTorch forward hardcodes components 0 and 1
    # (scores for n >= 2 are still returned, matching the module).
    z3 = z.reshape(tb, N, D)
    res = z3[:, 0, :] * scores[:, 0:1] + z3[:, 1, :] * scores[:, 1:2]

    res_ref[...] = res.astype(res_ref.dtype)
    score_ref[...] = scores.astype(score_ref.dtype)


@functools.partial(jax.jit, static_argnames=("block_b",))
def component_attention(z, x, wf, bf, wx, bx, block_b=None):
    """Matches the PyTorch module: returns (res (B, D), score (B, N, 1))."""
    B, N, D = z.shape
    H = wf.shape[1]
    if block_b is None:
        block_b = B              # demo size; 128 (v5e) / 256 (v6e, v7x) at scale
    assert B % block_b == 0

    # Free views (no transpose, no HBM roundtrip).
    z_flat = z.reshape(B * N, D)
    bf2 = bf.reshape(1, H)
    bx2 = bx.reshape(1, H)

    res, score = pl.pallas_call(
        functools.partial(_component_attention_kernel, N=N),
        out_shape=(
            jax.ShapeDtypeStruct((B, D), z.dtype),
            jax.ShapeDtypeStruct((B, N), jnp.float32),
        ),
        grid=(B // block_b,),
        in_specs=[
            pl.BlockSpec((block_b * N, D), lambda i: (i, 0)),   # z_flat tile
            pl.BlockSpec((block_b, D), lambda i: (i, 0)),       # x tile
            pl.BlockSpec((D, H), lambda i: (0, 0)),             # W_f (resident)
            pl.BlockSpec((1, H), lambda i: (0, 0)),             # b_f
            pl.BlockSpec((D, H), lambda i: (0, 0)),             # W_x
            pl.BlockSpec((1, H), lambda i: (0, 0)),             # b_x
        ],
        out_specs=(
            pl.BlockSpec((block_b, D), lambda i: (i, 0)),
            pl.BlockSpec((block_b, N), lambda i: (i, 0)),
        ),
        compiler_params=pltpu.CompilerParams(
            dimension_semantics=("parallel",)),
    )(z_flat, x, wf, bf2, wx, bx2)

    return res, score[..., None]


def reference(z, x, wf, bf, wx, bx):
    hz = jnp.tanh(jnp.einsum('bnd,dh->bnh', z, wf) + bf[None])
    hx = jnp.tanh(x @ wx + bx)
    logits = jnp.einsum('bnh,bh->bn', hz, hx)
    s = jax.nn.softmax(logits, axis=1)
    res = z[:, 0, :] * s[:, 0:1] + z[:, 1, :] * s[:, 1:2]
    return res, s[..., None]


if __name__ == "__main__":
    B, N, in_size, hidden_size = 2, 2, 16, 32

    key = jax.random.PRNGKey(0)
    kz, kx, kwf, kbf, kwx, kbx = jax.random.split(key, 6)

    # Inputs
    z = jax.random.normal(kz, (B, N, in_size), dtype=jnp.float32)
    x = jax.random.normal(kx, (B, in_size), dtype=jnp.float32)

    # nn.Linear-style init: U(-1/sqrt(in), 1/sqrt(in)); weights pre-transposed
    # to (in, hidden) so the projection is `v @ W + b`.
    bound = 1.0 / (in_size ** 0.5)
    wf = jax.random.uniform(kwf, (in_size, hidden_size), jnp.float32, -bound, bound)
    bf = jax.random.uniform(kbf, (1, hidden_size), jnp.float32, -bound, bound)
    wx = jax.random.uniform(kwx, (in_size, hidden_size), jnp.float32, -bound, bound)
    bx = jax.random.uniform(kbx, (1, hidden_size), jnp.float32, -bound, bound)

    # NOTE: the PyTorch forward's `ntype` argument is unused by the module.
    res, score = component_attention(z, x, wf, bf, wx, bx)
    jax.block_until_ready((res, score))

    res_ref, score_ref = reference(z, x, wf, bf, wx, bx)
    assert res.shape == (B, in_size) and score.shape == (B, N, 1)
    assert jnp.allclose(res, res_ref, atol=1e-5, rtol=1e-5)
    assert jnp.allclose(score, score_ref, atol=1e-5, rtol=1e-5)

    print("KERNEL_OK")
</pallas_src>

<mosaic_0001>
module attributes {stable_mosaic.version = 11 : i64} {
  func.func @_component_attention_kernel(%arg0: i32, %arg1: memref<4x16xf32, #tpu.memory_space<vmem>>, %arg2: memref<2x16xf32, #tpu.memory_space<vmem>>, %arg3: memref<16x32xf32, #tpu.memory_space<vmem>>, %arg4: memref<1x32xf32, #tpu.memory_space<vmem>>, %arg5: memref<16x32xf32, #tpu.memory_space<vmem>>, %arg6: memref<1x32xf32, #tpu.memory_space<vmem>>, %arg7: memref<2x16xf32, #tpu.memory_space<vmem>>, %arg8: memref<2x2xf32, #tpu.memory_space<vmem>>) attributes {dimension_semantics = [#tpu.dimension_semantics<parallel>], iteration_bounds = array<i64: 1>, scalar_prefetch = 0 : i64, scratch_operands = 0 : i64, tpu.core_type = #tpu.core_type<tc>, window_params = [{transform_indices = @transform_0, window_bounds = array<i64: 4, 16>}, {transform_indices = @transform_1, window_bounds = array<i64: 2, 16>}, {pipeline_mode = #tpu.pipeline_mode<synchronous>, transform_indices = @transform_2, window_bounds = array<i64: 16, 32>}, {pipeline_mode = #tpu.pipeline_mode<synchronous>, transform_indices = @transform_3, window_bounds = array<i64: 1, 32>}, {pipeline_mode = #tpu.pipeline_mode<synchronous>, transform_indices = @transform_4, window_bounds = array<i64: 16, 32>}, {pipeline_mode = #tpu.pipeline_mode<synchronous>, transform_indices = @transform_5, window_bounds = array<i64: 1, 32>}, {transform_indices = @transform_6, window_bounds = array<i64: 2, 16>}, {transform_indices = @transform_7, window_bounds = array<i64: 2, 2>}]} {
    %c0 = arith.constant 0 : index
    %c0_0 = arith.constant 0 : index
    %0 = vector.load %arg1[%c0, %c0_0] : memref<4x16xf32, #tpu.memory_space<vmem>>, vector<4x16xf32>
    %c0_1 = arith.constant 0 : index
    %c0_2 = arith.constant 0 : index
    %1 = vector.load %arg2[%c0_1, %c0_2] : memref<2x16xf32, #tpu.memory_space<vmem>>, vector<2x16xf32>
    %c0_3 = arith.constant 0 : index
    %c0_4 = arith.constant 0 : index
    %2 = vector.load %arg3[%c0_3, %c0_4] : memref<16x32xf32, #tpu.memory_space<vmem>>, vector<16x32xf32>
    %cst = arith.constant dense<0.000000e+00> : vector<4x32xf32>
    %3 = tpu.matmul %0, %2, %cst {dimension_numbers = #tpu.dot_dimension_numbers<[1], [0], [0], [1], [0, 0, 1, 1], [], []>} : vector<4x16xf32>, vector<16x32xf32>, vector<4x32xf32> -> vector<4x32xf32>
    %c0_5 = arith.constant 0 : index
    %c0_6 = arith.constant 0 : index
    %4 = vector.load %arg4[%c0_5, %c0_6] : memref<1x32xf32, #tpu.memory_space<vmem>>, vector<1x32xf32>
    %5 = vector.broadcast %4 : vector<1x32xf32> to vector<4x32xf32>
    %6 = arith.addf %3, %5 : vector<4x32xf32>
    %7 = math.tanh %6 : vector<4x32xf32>
    %c0_7 = arith.constant 0 : index
    %c0_8 = arith.constant 0 : index
    %8 = vector.load %arg5[%c0_7, %c0_8] : memref<16x32xf32, #tpu.memory_space<vmem>>, vector<16x32xf32>
    %cst_9 = arith.constant dense<0.000000e+00> : vector<2x32xf32>
    %9 = tpu.matmul %1, %8, %cst_9 {dimension_numbers = #tpu.dot_dimension_numbers<[1], [0], [0], [1], [0, 0, 1, 1], [], []>} : vector<2x16xf32>, vector<16x32xf32>, vector<2x32xf32> -> vector<2x32xf32>
    %c0_10 = arith.constant 0 : index
    %c0_11 = arith.constant 0 : index
    %10 = vector.load %arg6[%c0_10, %c0_11] : memref<1x32xf32, #tpu.memory_space<vmem>>, vector<1x32xf32>
    %11 = vector.broadcast %10 : vector<1x32xf32> to vector<2x32xf32>
    %12 = arith.addf %9, %11 : vector<2x32xf32>
    %13 = math.tanh %12 : vector<2x32xf32>
    %14 = vector.shape_cast %7 : vector<4x32xf32> to vector<2x2x32xf32>
    %15 = vector.shape_cast %13 : vector<2x32xf32> to vector<2x1x32xf32>
    %16 = vector.broadcast %15 : vector<2x1x32xf32> to vector<2x2x32xf32>
    %17 = arith.mulf %14, %16 : vector<2x2x32xf32>
    %cst_12 = arith.constant dense<0.000000e+00> : vector<2x2xf32>
    %18 = vector.multi_reduction <add>, %17, %cst_12 [2] : vector<2x2x32xf32> to vector<2x2xf32>
    %cst_13 = arith.constant dense<0xFF800000> : vector<2xf32>
    %19 = vector.multi_reduction <maximumf>, %18, %cst_13 [1] : vector<2x2xf32> to vector<2xf32>
    %20 = vector.shape_cast %19 : vector<2xf32> to vector<2x1xf32>
    %21 = vector.broadcast %20 : vector<2x1xf32> to vector<2x2xf32>
    %22 = arith.subf %18, %21 : vector<2x2xf32>
    %23 = math.exp %22 : vector<2x2xf32>
    %cst_14 = arith.constant dense<0.000000e+00> : vector<2xf32>
    %24 = vector.multi_reduction <add>, %23, %cst_14 [1] : vector<2x2xf32> to vector<2xf32>
    %25 = vector.shape_cast %24 : vector<2xf32> to vector<2x1xf32>
    %26 = tpu.reciprocal %25 {approx = true} : vector<2x1xf32> -> vector<2x1xf32>
    %27 = arith.mulf %25, %26 : vector<2x1xf32>
    %cst_15 = arith.constant 2.000000e+00 : f32
    %28 = vector.broadcast %cst_15 : f32 to vector<2x1xf32>
    %29 = arith.subf %28, %27 : vector<2x1xf32>
    %30 = arith.mulf %26, %29 : vector<2x1xf32>
    %31 = vector.broadcast %30 : vector<2x1xf32> to vector<2x2xf32>
    %32 = arith.mulf %23, %31 : vector<2x2xf32>
    %33 = vector.shape_cast %0 : vector<4x16xf32> to vector<2x2x16xf32>
    %34 = vector.extract_strided_slice %33 {offsets = [0, 0, 0], sizes = [2, 1, 16], strides = [1, 1, 1]} : vector<2x2x16xf32> to vector<2x1x16xf32>
    %35 = vector.shape_cast %34 : vector<2x1x16xf32> to vector<2x16xf32>
    %36 = vector.extract_strided_slice %32 {offsets = [0, 0], sizes = [2, 1], strides = [1, 1]} : vector<2x2xf32> to vector<2x1xf32>
    %37 = vector.broadcast %36 : vector<2x1xf32> to vector<2x16xf32>
    %38 = arith.mulf %35, %37 : vector<2x16xf32>
    %39 = vector.extract_strided_slice %33 {offsets = [0, 1, 0], sizes = [2, 1, 16], strides = [1, 1, 1]} : vector<2x2x16xf32> to vector<2x1x16xf32>
    %40 = vector.shape_cast %39 : vector<2x1x16xf32> to vector<2x16xf32>
    %41 = vector.extract_strided_slice %32 {offsets = [0, 1], sizes = [2, 1], strides = [1, 1]} : vector<2x2xf32> to vector<2x1xf32>
    %42 = vector.broadcast %41 : vector<2x1xf32> to vector<2x16xf32>
    %43 = arith.mulf %40, %42 : vector<2x16xf32>
    %44 = arith.addf %38, %43 : vector<2x16xf32>
    %c0_16 = arith.constant 0 : index
    %c0_17 = arith.constant 0 : index
    %45 = vector.load %arg7[%c0_16, %c0_17] : memref<2x16xf32, #tpu.memory_space<vmem>>, vector<2x16xf32>
    tpu.vector_store %arg7[%c0_16, %c0_17], %44 {strides = array<i32>} : memref<2x16xf32, #tpu.memory_space<vmem>>, vector<2x16xf32>,
    %c0_18 = arith.constant 0 : index
    %c0_19 = arith.constant 0 : index
    %46 = vector.load %arg8[%c0_18, %c0_19] : memref<2x2xf32, #tpu.memory_space<vmem>>, vector<2x2xf32>
    tpu.vector_store %arg8[%c0_18, %c0_19], %32 {strides = array<i32>} : memref<2x2xf32, #tpu.memory_space<vmem>>, vector<2x2xf32>,
    return
  }
  func.func @transform_0(%arg0: i32) -> (i32, i32) {
    %c0_i32 = arith.constant 0 : i32
    %c0_i32_0 = arith.constant 0 : i32
    return %arg0, %c0_i32 : i32, i32
  }
  func.func @transform_1(%arg0: i32) -> (i32, i32) {
    %c0_i32 = arith.constant 0 : i32
    %c0_i32_0 = arith.constant 0 : i32
    return %arg0, %c0_i32 : i32, i32
  }
  func.func @transform_2(%arg0: i32) -> (i32, i32) {
    %c0_i32 = arith.constant 0 : i32
    %c0_i32_0 = arith.constant 0 : i32
    %c0_i32_1 = arith.constant 0 : i32
    return %c0_i32, %c0_i32_0 : i32, i32
  }
  func.func @transform_3(%arg0: i32) -> (i32, i32) {
    %c0_i32 = arith.constant 0 : i32
    %c0_i32_0 = arith.constant 0 : i32
    %c0_i32_1 = arith.constant 0 : i32
    return %c0_i32, %c0_i32_0 : i32, i32
  }
  func.func @transform_4(%arg0: i32) -> (i32, i32) {
    %c0_i32 = arith.constant 0 : i32
    %c0_i32_0 = arith.constant 0 : i32
    %c0_i32_1 = arith.constant 0 : i32
    return %c0_i32, %c0_i32_0 : i32, i32
  }
  func.func @transform_5(%arg0: i32) -> (i32, i32) {
    %c0_i32 = arith.constant 0 : i32
    %c0_i32_0 = arith.constant 0 : i32
    %c0_i32_1 = arith.constant 0 : i32
    return %c0_i32, %c0_i32_0 : i32, i32
  }
  func.func @transform_6(%arg0: i32) -> (i32, i32) {
    %c0_i32 = arith.constant 0 : i32
    %c0_i32_0 = arith.constant 0 : i32
    return %arg0, %c0_i32 : i32, i32
  }
  func.func @transform_7(%arg0: i32) -> (i32, i32) {
    %c0_i32 = arith.constant 0 : i32
    %c0_i32_0 = arith.constant 0 : i32
    return %arg0, %c0_i32 : i32, i32
  }
}

</mosaic_0001>

<llo_original>
// kernel: component_attention.1
$region0: #{component_attention.1}
  #allocation0 [shape = 'u32[]', space=smem, size = 0x4, offset = 0x4, fixed_abs, tag = 'smem constant byte address 0x4 - core index']
  #allocation1 [shape = 'u32[144,128]{1,0:T(1,128)}', space=vmem, size = 0x12000, scoped, tag = 'internal scratch']
  %s0 = inlined_call_operand.hbm [shape: f32[4,16], index: 0, kind: input, shape index: {}]
  %s1 = inlined_call_operand.vmem [shape: f32[2,16], index: 1, kind: input, shape index: {}]
  %s2 = inlined_call_operand.hbm [shape: f32[16,32], index: 2, kind: input, shape index: {}]
  %s3 = inlined_call_operand.hbm [shape: f32[1,32], index: 3, kind: input, shape index: {}]
  %s4 = inlined_call_operand.vmem [shape: f32[16,32], index: 4, kind: input, shape index: {}]
  %s5 = inlined_call_operand.vmem [shape: f32[1,32], index: 5, kind: input, shape index: {}]
  %s6 = inlined_call_operand.hbm [shape: f32[2,16], index: 6, kind: output, shape index: {0}]
  %s7 = inlined_call_operand.hbm [shape: f32[2,2], index: 7, kind: output, shape index: {1}]
  %8 = xla_tuple %s6, %s7
  %s9 = sld [smem:[#allocation0]]
  $region54: #{component_attention.1} parent=0
    _
  %s11 = ssub.s32 1, %s9
  %s12 = scalar_select 0, %s11, %s9
  $region1: #{component_attention.1} parent=0
    #allocation2 [shape = 'u8[2048]{0}', space=vmem, size = 0x800, scoped, tag = 'input window, operand 0, single buffered']
    #allocation3 [shape = 's32[1]{0}', space=sflag, size = 0x4, scoped, tag = 'scoped memory for component_attention.1']
    #allocation4 [shape = 's32[1]{0}', space=sflag, size = 0x4, scoped, tag = 'scoped memory for component_attention.1']
    #allocation5 [shape = 'u8[8192]{0}', space=vmem, size = 0x2000, scoped, tag = 'input window, operand 2, single buffered']
    #allocation6 [shape = 's32[1]{0}', space=sflag, size = 0x4, scoped, tag = 'scoped memory for component_attention.1']
    #allocation7 [shape = 'u8[512]{0}', space=vmem, size = 0x400, scoped, tag = 'input window, operand 3, single buffered']
    #allocation8 [shape = 'u8[1024]{0}', space=vmem, size = 0x400, scoped, tag = 'output window, operand 0, single buffered']
    #allocation9 [shape = 'u8[1024]{0}', space=vmem, size = 0x400, scoped, tag = 'output window, operand 1, single buffered']
    #allocation10 [shape = 's32[1]{0}', space=sflag, size = 0x4, scoped, tag = 'scoped memory for component_attention.1']
    %13 = vsyncpa [#allocation3], 0
    %14 = vsyncpa [#allocation6], 0
    %15 = vsyncpa [#allocation4], 0
    %16 = vsyncpa [#allocation10], 0
    // Predicated region
    $region2: #{component_attention.1} parent=1 // pred_check
      _
    $region3: #{component_attention.1} parent=1 // pred_check_branch
      %18 = sbr.rel (0) target = $region5
    $region4: #{component_attention.1} parent=1 // pred_region
      %s20 = ssub.s32 64, 64
      %21 = vsyncadd [#allocation3], %s20
      %s23 = sshll.u32 [#allocation2], 4
      %s24 = int_to_ptr.vmem [resolvable:$true] %s23
      %26 = dma.hbm_to_vmem [thread:$0]  %s0, 64, %s24, [#allocation3]
    $region5: #{component_attention.1} parent=1 // pred_fallthru
      _
    // Predicated region
    $region6: #{component_attention.1} parent=1 // pred_check
      _
    $region7: #{component_attention.1} parent=1 // pred_check_branch
      %28 = sbr.rel (0) target = $region9
    $region8: #{component_attention.1} parent=1 // pred_region
      _
    $region9: #{component_attention.1} parent=1 // pred_fallthru
      _
    // Predicated region
    $region10: #{component_attention.1} parent=1 // pred_check
      _
    $region11: #{component_attention.1} parent=1 // pred_check_branch
      %30 = sbr.rel (0) target = $region13
    $region12: #{component_attention.1} parent=1 // pred_region
      %s32 = ssub.s32 256, 256
      %33 = vsyncadd [#allocation6], %s32
      %s34 = sshll.u32 [#allocation5], 4
      %s35 = int_to_ptr.vmem [resolvable:$true] %s34
      %40 = dma.hbm_to_vmem [thread:$0]  %s2, 256, %s35, [#allocation6], 128, 128, 8
    $region13: #{component_attention.1} parent=1 // pred_fallthru
      _
    // Predicated region
    $region14: #{component_attention.1} parent=1 // pred_check
      _
    $region15: #{component_attention.1} parent=1 // pred_check_branch
      %42 = sbr.rel (0) target = $region17
    $region16: #{component_attention.1} parent=1 // pred_region
      %s44 = ssub.s32 16, 16
      %45 = vsyncadd [#allocation6], %s44
      %s47 = sshll.u32 [#allocation7], 4
      %s48 = int_to_ptr.vmem [resolvable:$true] %s47
      %50 = dma.hbm_to_vmem [thread:$0]  %s3, 16, %s48, [#allocation6]
    $region17: #{component_attention.1} parent=1 // pred_fallthru
      _
    // Predicated region
    $region18: #{component_attention.1} parent=1 // pred_check
      _
    $region19: #{component_attention.1} parent=1 // pred_check_branch
      %52 = sbr.rel (0) target = $region21
    $region20: #{component_attention.1} parent=1 // pred_region
      _
    $region21: #{component_attention.1} parent=1 // pred_fallthru
      _
    // Predicated region
    $region22: #{component_attention.1} parent=1 // pred_check
      _
    $region23: #{component_attention.1} parent=1 // pred_check_branch
      %54 = sbr.rel (0) target = $region25
    $region24: #{component_attention.1} parent=1 // pred_region
      _
    $region25: #{component_attention.1} parent=1 // pred_fallthru
      _
    // Predicated region
    $region26: #{component_attention.1} parent=1 // pred_check
      _
    $region27: #{component_attention.1} parent=1 // pred_check_branch
      %56 = sbr.rel (0) target = $region29
    $region28: #{component_attention.1} parent=1 // pred_region
      %57 = dma.done [#allocation3], 64
    $region29: #{component_attention.1} parent=1 // pred_fallthru
      _
    // Predicated region
    $region30: #{component_attention.1} parent=1 // pred_check
      _
    $region31: #{component_attention.1} parent=1 // pred_check_branch
      %59 = sbr.rel (0) target = $region33
    $region32: #{component_attention.1} parent=1 // pred_region
      %60 = dma.done [#allocation6], 256
    $region33: #{component_attention.1} parent=1 // pred_fallthru
      _
    // Predicated region
    $region34: #{component_attention.1} parent=1 // pred_check
      _
    $region35: #{component_attention.1} parent=1 // pred_check_branch
      %62 = sbr.rel (0) target = $region37
    $region36: #{component_attention.1} parent=1 // pred_region
      %63 = dma.done [#allocation6], 16
    $region37: #{component_attention.1} parent=1 // pred_fallthru
      _
    %v64 = vld [vmem:[#allocation2] sm:$0xf]
    %v65 = vld [vmem:[%s1] sm:$0x3]
    %v66 = vld [vmem:[#allocation5] sm:$0xff]
    %v67 = vld [vmem:[#allocation5 + $0x8] sm:$0xff]
    %v68 = vld [vmem:[#allocation7] sm:$0x1]
    %v70 = vlaneseq
    %v71 = vshrl.u32 %v70, 7
    %v72 = vsub.s32 0, %v71
    %v73 = vrot.slane %v68, %v72
    %vm75 = vcmask 130048
    %v77 = vsel %vm75, %v64, 0
    %79 = vmatprep.subr.mxu0 0.0
    %80 = vmatpush1.msra.mxu0 %v66
    %81 = vmatprep.subr.mxu0 0.0
    %82 = vmatpush1.msra.mxu0 %v67
    %83 = vmatprep.subr.mxu0 0.0
    %84 = vmatpush1.msra.mxu0 0.0
    %85 = vmatprep.subr.mxu0 0.0
    %86 = vmatpush1.msra.mxu0 0.0
    %87 = vmatprep.subr.mxu0 0.0
    %88 = vmatpush1.msra.mxu0 0.0
    %89 = vmatprep.subr.mxu0 0.0
    %90 = vmatpush1.msra.mxu0 0.0
    %91 = vmatprep.subr.mxu0 0.0
    %92 = vmatpush1.msra.mxu0 0.0
    %93 = vmatprep.subr.mxu0 0.0
    %94 = vmatpush1.msra.mxu0 0.0
    %95 = vmatprep.subr.mxu0 0.0
    %96 = vmatpush1.msra.mxu0 0.0
    %97 = vmatprep.subr.mxu0 0.0
    %98 = vmatpush1.msra.mxu0 0.0
    %99 = vmatprep.subr.mxu0 0.0
    %100 = vmatpush1.msra.mxu0 0.0
    %101 = vmatprep.subr.mxu0 0.0
    %102 = vmatpush1.msra.mxu0 0.0
    %103 = vmatprep.subr.mxu0 0.0
    %104 = vmatpush1.msra.mxu0 0.0
    %105 = vmatprep.subr.mxu0 0.0
    %106 = vmatpush1.msra.mxu0 0.0
    %107 = vmatprep.subr.mxu0 0.0
    %108 = vmatpush1.msra.mxu0 0.0
    %109 = vmatprep.subr.mxu0 0.0
    %110 = vmatpush1.msra.mxu0 0.0
    %111 = vmatprep.subr.mxu0 0.0
    %112 = vmatpush1.msra.mxu0 0.0
    %113 = vmatprep.subr.mxu0 0.0
    %114 = vmatpush1.msra.mxu0 0.0
    %115 = vmatprep.subr.mxu0 0.0
    %116 = vmatpush1.msra.mxu0 0.0
    %117 = vmatprep.subr.mxu0 0.0
    %118 = vmatpush1.msra.mxu0 0.0
    %119 = vmatprep.subr.mxu0 0.0
    %120 = vmatpush1.msra.mxu0 0.0
    %121 = vmatprep.subr.mxu0 0.0
    %122 = vmatpush1.msra.mxu0 0.0
    %123 = vmatprep.subr.mxu0 0.0
    %124 = vmatpush1.msra.mxu0 0.0
    %125 = vmatprep.subr.mxu0 0.0
    %126 = vmatpush1.msra.mxu0 0.0
    %127 = vmatprep.subr.mxu0 0.0
    %128 = vmatpush1.msra.mxu0 0.0
    %129 = vmatprep.subr.mxu0 0.0
    %130 = vmatpush1.msra.mxu0 0.0
    %131 = vmatprep.subr.mxu0 0.0
    %132 = vmatpush1.msra.mxu0 0.0
    %133 = vmatprep.subr.mxu0 0.0
    %134 = vmatpush1.msra.mxu0 0.0
    %135 = vmatprep.subr.mxu0 0.0
    %136 = vmatpush1.msra.mxu0 0.0
    %137 = vmatprep.subr.mxu0 0.0
    %138 = vmatpush1.msra.mxu0 0.0
    %139 = vmatprep.subr.mxu0 0.0
    %140 = vmatpush1.msra.mxu0 0.0
    %141 = vmatprep.subr.mxu0 0.0
    %142 = vmatpush1.msra.mxu0 0.0
    %143 = vmatprep.mubr.f32.mxu0 0.0
    %144 = vmatmul.mubr.f32.gmra.mrb[0].mxu0 %v77
    %v145 = vpop.f32.mrb[0].mxu0
    %v146 = vadd.f32 %v73, %v145
    %v147 = vpop.f32.mrb[0].mxu0
    %148 = vdwg.mxu0
    %v149 = vtanh.pop %v146
    %v150 = vld [vmem:[%s4] sm:$0xff]
    %v151 = vld [vmem:[%s4 + $0x8] sm:$0xff]
    %v152 = vld [vmem:[%s5] sm:$0x1]
    %v154 = vlaneseq
    %v155 = vshrl.u32 %v154, 7
    %v156 = vsub.s32 0, %v155
    %v157 = vrot.slane %v152, %v156
    %v160 = vsel %vm75, %v65, 0
    %162 = vmatprep.subr.mxu0 0.0
    %163 = vmatpush1.msra.mxu0 %v150
    %164 = vmatprep.subr.mxu0 0.0
    %165 = vmatpush1.msra.mxu0 %v151
    %166 = vmatprep.subr.mxu0 0.0
    %167 = vmatpush1.msra.mxu0 0.0
    %168 = vmatprep.subr.mxu0 0.0
    %169 = vmatpush1.msra.mxu0 0.0
    %170 = vmatprep.subr.mxu0 0.0
    %171 = vmatpush1.msra.mxu0 0.0
    %172 = vmatprep.subr.mxu0 0.0
    %173 = vmatpush1.msra.mxu0 0.0
    %174 = vmatprep.subr.mxu0 0.0
    %175 = vmatpush1.msra.mxu0 0.0
    %176 = vmatprep.subr.mxu0 0.0
    %177 = vmatpush1.msra.mxu0 0.0
    %178 = vmatprep.subr.mxu0 0.0
    %179 = vmatpush1.msra.mxu0 0.0
    %180 = vmatprep.subr.mxu0 0.0
    %181 = vmatpush1.msra.mxu0 0.0
    %182 = vmatprep.subr.mxu0 0.0
    %183 = vmatpush1.msra.mxu0 0.0
    %184 = vmatprep.subr.mxu0 0.0
    %185 = vmatpush1.msra.mxu0 0.0
    %186 = vmatprep.subr.mxu0 0.0
    %187 = vmatpush1.msra.mxu0 0.0
    %188 = vmatprep.subr.mxu0 0.0
    %189 = vmatpush1.msra.mxu0 0.0
    %190 = vmatprep.subr.mxu0 0.0
    %191 = vmatpush1.msra.mxu0 0.0
    %192 = vmatprep.subr.mxu0 0.0
    %193 = vmatpush1.msra.mxu0 0.0
    %194 = vmatprep.subr.mxu0 0.0
    %195 = vmatpush1.msra.mxu0 0.0
    %196 = vmatprep.subr.mxu0 0.0
    %197 = vmatpush1.msra.mxu0 0.0
    %198 = vmatprep.subr.mxu0 0.0
    %199 = vmatpush1.msra.mxu0 0.0
    %200 = vmatprep.subr.mxu0 0.0
    %201 = vmatpush1.msra.mxu0 0.0
    %202 = vmatprep.subr.mxu0 0.0
    %203 = vmatpush1.msra.mxu0 0.0
    %204 = vmatprep.subr.mxu0 0.0
    %205 = vmatpush1.msra.mxu0 0.0
    %206 = vmatprep.subr.mxu0 0.0
    %207 = vmatpush1.msra.mxu0 0.0
    %208 = vmatprep.subr.mxu0 0.0
    %209 = vmatpush1.msra.mxu0 0.0
    %210 = vmatprep.subr.mxu0 0.0
    %211 = vmatpush1.msra.mxu0 0.0
    %212 = vmatprep.subr.mxu0 0.0
    %213 = vmatpush1.msra.mxu0 0.0
    %214 = vmatprep.subr.mxu0 0.0
    %215 = vmatpush1.msra.mxu0 0.0
    %216 = vmatprep.subr.mxu0 0.0
    %217 = vmatpush1.msra.mxu0 0.0
    %218 = vmatprep.subr.mxu0 0.0
    %219 = vmatpush1.msra.mxu0 0.0
    %220 = vmatprep.subr.mxu0 0.0
    %221 = vmatpush1.msra.mxu0 0.0
    %222 = vmatprep.subr.mxu0 0.0
    %223 = vmatpush1.msra.mxu0 0.0
    %224 = vmatprep.subr.mxu0 0.0
    %225 = vmatpush1.msra.mxu0 0.0
    %226 = vmatprep.mubr.f32.mxu0 0.0
    %227 = vmatmul.mubr.f32.gmra.mrb[0].mxu0 %v160
    %v228 = vpop.f32.mrb[0].mxu0
    %v229 = vadd.f32 %v157, %v228
    %v230 = vpop.f32.mrb[0].mxu0
    %231 = vdwg.mxu0
    %v232 = vtanh.pop %v229
    %v235 = vunpack.c.l.s4 1983009808
    %v236 = vunpack.c.0.s8 %v235
    %v237 = vlaneseq
    %v238 = vshrl.u32 %v237, 7
    %v239 = vsub.s32 %v236, %v238
    %v240 = vrot.slane %v149, %v239
    %v241 = vcombine.high %v240, %v240
    %v246 = vunpack.c.l.s4 1966171168
    %v247 = vunpack.c.0.s8 %v246
    %v248 = vlaneseq
    %v249 = vshrl.u32 %v248, 7
    %v250 = vsub.s32 %v247, %v249
    %v251 = vrot.slane %v232, %v250
    %v252 = vcombine.high %v251, %v251
    %v254 = vunpack.c.l.s4 1966171168
    %v255 = vunpack.c.0.s8 %v254
    %v256 = vlaneseq
    %v257 = vshrl.u32 %v256, 7
    %v258 = vsub.s32 %v255, %v257
    %v259 = vrot.slane %v251, %v258
    %v261 = vunpack.c.l.s4 1966171168
    %v262 = vunpack.c.0.s8 %v261
    %v263 = vlaneseq
    %v264 = vshrl.u32 %v263, 7
    %v265 = vsub.s32 %v262, %v264
    %v266 = vrot.slane %v252, %v265
    %v267 = vlaneseq
    %v268 = vshrl.u32 %v267, 7
    %v269 = vsub.s32 0, %v268
    %v270 = vrot.slane %v259, %v269
    %v271 = vlaneseq
    %v272 = vshrl.u32 %v271, 7
    %v273 = vsub.s32 0, %v272
    %v274 = vrot.slane %v266, %v273
    %v277 = vmul.f32 %v240, %v270
    %v278 = vmul.f32 %v241, %v274
    %vm279 = vcmask 254976
    %v280 = vsel %vm279, %v277, 0.0
    %281 = vadd.xlane.f32.xlu0 %v280
    %v282 = vpop.xlane.xlu0 %281
    %v283 = vsel %vm279, %v278, 0.0
    %284 = vadd.xlane.f32.xlu0 %v283
    %v285 = vpop.xlane.xlu0 %284
    %v288 = vlaneseq
    %v289 = vand.u32 %v288, 127
    %v290 = vlaneseq
    %v291 = vshrl.u32 %v290, 7
    %v292 = vsub.s32 %v289, %v291
    %v293 = vrot.slane %v282, %v292
    %v294 = vlaneseq
    %v295 = vshrl.u32 %v294, 7
    %v296 = vsub.s32 %v289, %v295
    %v297 = vrot.slane %v285, %v296
    %vm298 = vcmask 1041409
    %v299 = vsel %vm298, %v297, %v293
    %vm301 = vcmask 9216
    %v302 = vsel %vm301, %v299, -inf
    %303 = vmax.xlane.f32.xlu0 %v302
    %v304 = vpop.xlane.xlu0 %303
    %v306 = vlaneseq
    %v307 = vshrl.u32 %v306, 7
    %v308 = vsub.s32 0, %v307
    %v309 = vrot.slane %v304, %v308
    %v310 = vlaneseq
    %v311 = vshrl.u32 %v310, 7
    %v312 = vsub.s32 1, %v311
    %v313 = vrot.slane %v304, %v312
    %v316 = vsub.f32 %v282, %v309
    %v317 = vsub.f32 %v285, %v313
    %v318 = vmul.f32 %v316, 1.442695
    %v319 = vpow.pop %v318
    %v320 = vmul.f32 %v317, 1.442695
    %v321 = vpow.pop %v320
    %324 = vset.pattern.permute.xlu0 0
    %325 = vperm.xlu0 %324, %v319
    %v326 = vpop.permute.xlu0 %325
    %327 = vset.pattern.permute.xlu0 0
    %328 = vperm.xlu0 %327, %v321
    %v329 = vpop.permute.xlu0 %328
    %v330 = vlaneseq
    %v331 = vshrl.u32 %v330, 7
    %v332 = vsub.s32 %v289, %v331
    %v333 = vrot.slane %v326, %v332
    %v334 = vlaneseq
    %v335 = vshrl.u32 %v334, 7
    %v336 = vsub.s32 %v289, %v335
    %v337 = vrot.slane %v329, %v336
    %v338 = vsel %vm298, %v337, %v333
    %v340 = vsel %vm301, %v338, 0.0
    %341 = vadd.xlane.f32.xlu0 %v340
    %v342 = vpop.xlane.xlu0 %341
    %v343 = vrcp.pop %v342
    %v344 = vmul.f32 %v342, %v343
    %v345 = vsub.f32 2.0, %v344
    %v346 = vmul.f32 %v343, %v345
    %v348 = vlaneseq
    %v349 = vshrl.u32 %v348, 7
    %v350 = vsub.s32 0, %v349
    %v351 = vrot.slane %v346, %v350
    %v352 = vlaneseq
    %v353 = vshrl.u32 %v352, 7
    %v354 = vsub.s32 1, %v353
    %v355 = vrot.slane %v346, %v354
    %v358 = vmul.f32 %v319, %v351
    %v359 = vmul.f32 %v321, %v355
    %v361 = vunpack.c.l.s4 1983009808
    %v362 = vunpack.c.0.s8 %v361
    %v363 = vlaneseq
    %v364 = vshrl.u32 %v363, 7
    %v365 = vsub.s32 %v362, %v364
    %v366 = vrot.slane %v64, %v365
    %v367 = vcombine.high %v366, %v366
    %v370 = vlaneseq
    %v371 = vshrl.u32 %v370, 7
    %v372 = vsub.s32 0, %v371
    %v373 = vrot.slane %v358, %v372
    %v374 = vlaneseq
    %v375 = vshrl.u32 %v374, 7
    %v376 = vsub.s32 0, %v375
    %v377 = vrot.slane %v359, %v376
    %v380 = vcombine.high %v373, %v373
    %v382 = vunpack.c.l.s4 1983009808
    %v383 = vunpack.c.0.s8 %v382
    %v384 = vlaneseq
    %v385 = vshrl.u32 %v384, 7
    %v386 = vsub.s32 %v383, %v385
    %v387 = vrot.slane %v373, %v386
    %v389 = vunpack.c.l.s4 1983009808
    %v390 = vunpack.c.0.s8 %v389
    %v391 = vlaneseq
    %v392 = vshrl.u32 %v391, 7
    %v393 = vsub.s32 %v390, %v392
    %v394 = vrot.slane %v380, %v393
    %v395 = vcombine.high %v387, %v387
    %v396 = vcombine.high %v394, %v394
    %v397 = vcombine.high %v377, %v377
    %v399 = vunpack.c.l.s4 1983009808
    %v400 = vunpack.c.0.s8 %v399
    %v401 = vlaneseq
    %v402 = vshrl.u32 %v401, 7
    %v403 = vsub.s32 %v400, %v402
    %v404 = vrot.slane %v377, %v403
    %v406 = vunpack.c.l.s4 1983009808
    %v407 = vunpack.c.0.s8 %v406
    %v408 = vlaneseq
    %v409 = vshrl.u32 %v408, 7
    %v410 = vsub.s32 %v407, %v409
    %v411 = vrot.slane %v397, %v410
    %v412 = vcombine.high %v404, %v404
    %v413 = vcombine.high %v411, %v411
    %v414 = vcombine.low %v387, %v395
    %v415 = vcombine.low %v394, %v396
    %v417 = vunpack.c.l.s4 1983009808
    %v418 = vunpack.c.0.s8 %v417
    %v419 = vlaneseq
    %v420 = vshrl.u32 %v419, 7
    %v421 = vsub.s32 %v418, %v420
    %v422 = vrot.slane %v414, %v421
    %v424 = vunpack.c.l.s4 1983009808
    %v425 = vunpack.c.0.s8 %v424
    %v426 = vlaneseq
    %v427 = vshrl.u32 %v426, 7
    %v428 = vsub.s32 %v425, %v427
    %v429 = vrot.slane %v415, %v428
    %v430 = vcombine.low %v422, %v429
    %v431 = vcombine.low %v404, %v412
    %v432 = vcombine.low %v411, %v413
    %v434 = vunpack.c.l.s4 1983009808
    %v435 = vunpack.c.0.s8 %v434
    %v436 = vlaneseq
    %v437 = vshrl.u32 %v436, 7
    %v438 = vsub.s32 %v435, %v437
    %v439 = vrot.slane %v431, %v438
    %v441 = vunpack.c.l.s4 1983009808
    %v442 = vunpack.c.0.s8 %v441
    %v443 = vlaneseq
    %v444 = vshrl.u32 %v443, 7
    %v445 = vsub.s32 %v442, %v444
    %v446 = vrot.slane %v432, %v445
    %v447 = vcombine.low %v439, %v446
    %448 = vset.pattern.permute.xlu0 0
    %449 = vperm.xlu0 %448, %v430
    %v450 = vpop.permute.xlu0 %449
    %451 = vset.pattern.permute.xlu0 0
    %452 = vperm.xlu0 %451, %v430
    %v453 = vpop.permute.xlu0 %452
    %454 = vset.pattern.permute.xlu0 0
    %455 = vperm.xlu0 %454, %v447
    %v456 = vpop.permute.xlu0 %455
    %457 = vset.pattern.permute.xlu0 0
    %458 = vperm.xlu0 %457, %v447
    %v459 = vpop.permute.xlu0 %458
    %v460 = vlaneseq
    %v461 = vshrl.u32 %v460, 7
    %v462 = vsub.s32 %v289, %v461
    %v463 = vrot.slane %v450, %v462
    %v464 = vadd.s32 %v289, 4294967288
    %v465 = vlaneseq
    %v466 = vshrl.u32 %v465, 7
    %v467 = vsub.s32 %v464, %v466
    %v468 = vrot.slane %v453, %v467
    %vm469 = vcmask 130112
    %v470 = vsel %vm469, %v468, %v463
    %v471 = vlaneseq
    %v472 = vshrl.u32 %v471, 7
    %v473 = vsub.s32 %v289, %v472
    %v474 = vrot.slane %v456, %v473
    %v475 = vlaneseq
    %v476 = vshrl.u32 %v475, 7
    %v477 = vsub.s32 %v464, %v476
    %v478 = vrot.slane %v459, %v477
    %v479 = vsel %vm469, %v478, %v474
    %v481 = vunpack.c.l.s4 1983009808
    %v482 = vunpack.c.0.s8 %v481
    %v483 = vlaneseq
    %v484 = vshrl.u32 %v483, 7
    %v485 = vsub.s32 %v482, %v484
    %v486 = vrot.slane %v470, %v485
    %v488 = vunpack.c.l.s4 1983009808
    %v489 = vunpack.c.0.s8 %v488
    %v490 = vlaneseq
    %v491 = vshrl.u32 %v490, 7
    %v492 = vsub.s32 %v489, %v491
    %v493 = vrot.slane %v479, %v492
    %v496 = vmul.f32 %v366, %v486
    %v497 = vmul.f32 %v367, %v493
    %v498 = vlaneseq
    %v499 = vshrl.u32 %v498, 7
    %v500 = vsub.s32 1, %v499
    %v501 = vrot.slane %v358, %v500
    %v502 = vlaneseq
    %v503 = vshrl.u32 %v502, 7
    %v504 = vsub.s32 1, %v503
    %v505 = vrot.slane %v359, %v504
    %v508 = vcombine.high %v501, %v501
    %v510 = vunpack.c.l.s4 1983009808
    %v511 = vunpack.c.0.s8 %v510
    %v512 = vlaneseq
    %v513 = vshrl.u32 %v512, 7
    %v514 = vsub.s32 %v511, %v513
    %v515 = vrot.slane %v501, %v514
    %v517 = vunpack.c.l.s4 1983009808
    %v518 = vunpack.c.0.s8 %v517
    %v519 = vlaneseq
    %v520 = vshrl.u32 %v519, 7
    %v521 = vsub.s32 %v518, %v520
    %v522 = vrot.slane %v508, %v521
    %v523 = vcombine.high %v515, %v515
    %v524 = vcombine.high %v522, %v522
    %v525 = vcombine.high %v505, %v505
    %v527 = vunpack.c.l.s4 1983009808
    %v528 = vunpack.c.0.s8 %v527
    %v529 = vlaneseq
    %v530 = vshrl.u32 %v529, 7
    %v531 = vsub.s32 %v528, %v530
    %v532 = vrot.slane %v505, %v531
    %v534 = vunpack.c.l.s4 1983009808
    %v535 = vunpack.c.0.s8 %v534
    %v536 = vlaneseq
    %v537 = vshrl.u32 %v536, 7
    %v538 = vsub.s32 %v535, %v537
    %v539 = vrot.slane %v525, %v538
    %v540 = vcombine.high %v532, %v532
    %v541 = vcombine.high %v539, %v539
    %v542 = vcombine.low %v515, %v523
    %v543 = vcombine.low %v522, %v524
    %v545 = vunpack.c.l.s4 1983009808
    %v546 = vunpack.c.0.s8 %v545
    %v547 = vlaneseq
    %v548 = vshrl.u32 %v547, 7
    %v549 = vsub.s32 %v546, %v548
    %v550 = vrot.slane %v542, %v549
    %v552 = vunpack.c.l.s4 1983009808
    %v553 = vunpack.c.0.s8 %v552
    %v554 = vlaneseq
    %v555 = vshrl.u32 %v554, 7
    %v556 = vsub.s32 %v553, %v555
    %v557 = vrot.slane %v543, %v556
    %v558 = vcombine.low %v550, %v557
    %v559 = vcombine.low %v532, %v540
    %v560 = vcombine.low %v539, %v541
    %v562 = vunpack.c.l.s4 1983009808
    %v563 = vunpack.c.0.s8 %v562
    %v564 = vlaneseq
    %v565 = vshrl.u32 %v564, 7
    %v566 = vsub.s32 %v563, %v565
    %v567 = vrot.slane %v559, %v566
    %v569 = vunpack.c.l.s4 1983009808
    %v570 = vunpack.c.0.s8 %v569
    %v571 = vlaneseq
    %v572 = vshrl.u32 %v571, 7
    %v573 = vsub.s32 %v570, %v572
    %v574 = vrot.slane %v560, %v573
    %v575 = vcombine.low %v567, %v574
    %576 = vset.pattern.permute.xlu0 0
    %577 = vperm.xlu0 %576, %v558
    %v578 = vpop.permute.xlu0 %577
    %579 = vset.pattern.permute.xlu0 0
    %580 = vperm.xlu0 %579, %v558
    %v581 = vpop.permute.xlu0 %580
    %582 = vset.pattern.permute.xlu0 0
    %583 = vperm.xlu0 %582, %v575
    %v584 = vpop.permute.xlu0 %583
    %585 = vset.pattern.permute.xlu0 0
    %586 = vperm.xlu0 %585, %v575
    %v587 = vpop.permute.xlu0 %586
    %v588 = vlaneseq
    %v589 = vshrl.u32 %v588, 7
    %v590 = vsub.s32 %v289, %v589
    %v591 = vrot.slane %v578, %v590
    %v592 = vlaneseq
    %v593 = vshrl.u32 %v592, 7
    %v594 = vsub.s32 %v464, %v593
    %v595 = vrot.slane %v581, %v594
    %v596 = vsel %vm469, %v595, %v591
    %v597 = vlaneseq
    %v598 = vshrl.u32 %v597, 7
    %v599 = vsub.s32 %v289, %v598
    %v600 = vrot.slane %v584, %v599
    %v601 = vlaneseq
    %v602 = vshrl.u32 %v601, 7
    %v603 = vsub.s32 %v464, %v602
    %v604 = vrot.slane %v587, %v603
    %v605 = vsel %vm469, %v604, %v600
    %v607 = vunpack.c.l.s4 1983009808
    %v608 = vunpack.c.0.s8 %v607
    %v609 = vlaneseq
    %v610 = vshrl.u32 %v609, 7
    %v611 = vsub.s32 %v608, %v610
    %v612 = vrot.slane %v596, %v611
    %v614 = vunpack.c.l.s4 1983009808
    %v615 = vunpack.c.0.s8 %v614
    %v616 = vlaneseq
    %v617 = vshrl.u32 %v616, 7
    %v618 = vsub.s32 %v615, %v617
    %v619 = vrot.slane %v605, %v618
    %v620 = vrot.slane %v612, 7
    %v621 = vrot.slane %v619, 7
    %v624 = vmul.f32 %v366, %v620
    %v625 = vmul.f32 %v367, %v621
    %v628 = vrot.slane %v624, 7
    %v629 = vrot.slane %v628, 2
    %v630 = vrot.slane %v625, 7
    %v631 = vrot.slane %v630, 2
    %v634 = vadd.f32 %v496, %v629
    %v635 = vadd.f32 %v497, %v631
    %v638 = vlaneseq
    %v639 = vshrl.u32 %v638, 7
    %v640 = vsub.s32 0, %v639
    %v641 = vrot.slane %v634, %v640
    %v642 = vlaneseq
    %v643 = vshrl.u32 %v642, 7
    %v644 = vsub.s32 0, %v643
    %v645 = vrot.slane %v635, %v644
    %v646 = vsel %vm298, %v645, %v641
    %vm648 = vcmask 123904
    %649 = vst.msk [vmem:[#allocation8] sm:$0x3] %vm648, %v646
    %652 = vset.pattern.permute.xlu0 0
    %653 = vperm.xlu0 %652, %v358
    %v654 = vpop.permute.xlu0 %653
    %655 = vset.pattern.permute.xlu0 0
    %656 = vperm.xlu0 %655, %v359
    %v657 = vpop.permute.xlu0 %656
    %v658 = vlaneseq
    %v659 = vshrl.u32 %v658, 7
    %v660 = vsub.s32 %v289, %v659
    %v661 = vrot.slane %v654, %v660
    %v662 = vlaneseq
    %v663 = vshrl.u32 %v662, 7
    %v664 = vsub.s32 %v289, %v663
    %v665 = vrot.slane %v657, %v664
    %v666 = vsel %vm298, %v665, %v661
    %668 = vst.msk [vmem:[#allocation9] sm:$0x3] %vm301, %v666
    // Predicated region
    $region38: #{component_attention.1} parent=1 // pred_check
      _
    $region39: #{component_attention.1} parent=1 // pred_check_branch
      %670 = sbr.rel (0) target = $region41
    $region40: #{component_attention.1} parent=1 // pred_region
      %s672 = ssub.s32 32, 32
      %673 = vsyncadd [#allocation4], %s672
      %s675 = sshll.u32 [#allocation8], 4
      %s676 = int_to_ptr.vmem [resolvable:$true] %s675
      %678 = dma.vmem_to_hbm [thread:$0]  %s676, 32, %s6, [#allocation4]
    $region41: #{component_attention.1} parent=1 // pred_fallthru
      _
    // Predicated region
    $region42: #{component_attention.1} parent=1 // pred_check
      _
    $region43: #{component_attention.1} parent=1 // pred_check_branch
      %680 = sbr.rel (0) target = $region45
    $region44: #{component_attention.1} parent=1 // pred_region
      %s682 = ssub.s32 32, 32
      %683 = vsyncadd [#allocation10], %s682
      %s685 = sshll.u32 [#allocation9], 4
      %s686 = int_to_ptr.vmem [resolvable:$true] %s685
      %688 = dma.vmem_to_hbm [thread:$0]  %s686, 32, %s7, [#allocation10]
    $region45: #{component_attention.1} parent=1 // pred_fallthru
      _
    // Predicated region
    $region46: #{component_attention.1} parent=1 // pred_check
      _
    $region47: #{component_attention.1} parent=1 // pred_check_branch
      %690 = sbr.rel (0) target = $region49
    $region48: #{component_attention.1} parent=1 // pred_region
      %691 = dma.done [#allocation4], 32
    $region49: #{component_attention.1} parent=1 // pred_fallthru
      _
    // Predicated region
    $region50: #{component_attention.1} parent=1 // pred_check
      _
    $region51: #{component_attention.1} parent=1 // pred_check_branch
      %693 = sbr.rel (0) target = $region53
    $region52: #{component_attention.1} parent=1 // pred_region
      %694 = dma.done [#allocation10], 32
    $region53: #{component_attention.1} parent=1 // pred_fallthru
      _
    %695 = vsyncpa [#allocation3], 1
    %696 = vsyncpa [#allocation6], 1
    %697 = vsyncpa [#allocation4], 1
    %698 = vsyncpa [#allocation10], 1

</llo_original>
